<compile_context>
chip_gen: v6e
topology: v6e:2x2x1
jax: 0.10.0
libtpu: 0.0.40
codegen_flags: <defaults>
</compile_context>

<pallas_src>
import jax
import jax.numpy as jnp
from jax.experimental import pallas as pl
from jax.experimental.pallas import tpu as pltpu


def _critic_kernel_vec_out(obs_ref, act_ref, w1o_ref, w1a_ref, b1_ref,
                           w2_ref, b2_ref, w3_ref, b3_ref, o_ref):
    # Layer 1: split matmul replaces concat([obs, action]) @ W1.
    h1 = (jnp.dot(obs_ref[...], w1o_ref[...], preferred_element_type=jnp.float32)
          + jnp.dot(act_ref[...], w1a_ref[...], preferred_element_type=jnp.float32)
          + b1_ref[...])
    h1 = jnp.maximum(h1, 0.0)
    # Layer 2
    h2 = jnp.dot(h1.astype(w2_ref.dtype), w2_ref[...],
                 preferred_element_type=jnp.float32) + b2_ref[...]
    h2 = jnp.maximum(h2, 0.0)
    # Layer 3 (out_size == 1): VPU multiply + lane reduction instead of a
    # 1-lane MXU matmul.  w3_ref is a (1, hidden) row.
    q = jnp.sum(h2 * w3_ref[...], axis=-1, keepdims=True) + b3_ref[...]
    o_ref[...] = q.astype(o_ref.dtype)


def _critic_kernel_mat_out(obs_ref, act_ref, w1o_ref, w1a_ref, b1_ref,
                           w2_ref, b2_ref, w3_ref, b3_ref, o_ref):
    # Same as above but with a general (hidden, out_size) final matmul.
    h1 = (jnp.dot(obs_ref[...], w1o_ref[...], preferred_element_type=jnp.float32)
          + jnp.dot(act_ref[...], w1a_ref[...], preferred_element_type=jnp.float32)
          + b1_ref[...])
    h1 = jnp.maximum(h1, 0.0)
    h2 = jnp.dot(h1.astype(w2_ref.dtype), w2_ref[...],
                 preferred_element_type=jnp.float32) + b2_ref[...]
    h2 = jnp.maximum(h2, 0.0)
    q = jnp.dot(h2.astype(w3_ref.dtype), w3_ref[...],
                preferred_element_type=jnp.float32) + b3_ref[...]
    o_ref[...] = q.astype(o_ref.dtype)


def _round_up(x, m):
    return -(-x // m) * m


def critic_forward(obs, action, params, *, compute_dtype=jnp.float32, tm_max=512):
    """Pallas forward pass. params = (w1, b1, w2, b2, w3, b3),
    weights stored [in_features, out_features]."""
    w1, b1, w2, b2, w3, b3 = params
    batch, obs_dim = obs.shape
    act_dim = action.shape[1]
    hidden = w1.shape[1]
    out_size = w3.shape[1]

    cd = compute_dtype
    obs_c = obs.astype(cd)
    act_c = action.astype(cd)
    # Static split of W1 removes the need to concat activations.
    w1o = w1[:obs_dim].astype(cd)
    w1a = w1[obs_dim:].astype(cd)
    w2c = w2.astype(cd)
    # Biases as (1, N) rows; kept in f32 (they add to the f32 accumulator).
    b1r = b1.reshape(1, hidden).astype(jnp.float32)
    b2r = b2.reshape(1, hidden).astype(jnp.float32)
    b3r = b3.reshape(1, out_size).astype(jnp.float32)

    if out_size == 1:
        w3k = w3.reshape(1, hidden).astype(jnp.float32)   # row for VPU reduce
        kernel = _critic_kernel_vec_out
    else:
        w3k = w3.astype(cd)
        kernel = _critic_kernel_mat_out

    # Batch tiling: TM multiple of 8 (f32 sublane), capped so double-buffered
    # activation tiles stay far under the v7x 64 MiB VMEM budget.
    tm = min(tm_max, _round_up(batch, 8))
    padded = _round_up(batch, tm)
    if padded != batch:
        pad = padded - batch
        obs_c = jnp.pad(obs_c, ((0, pad), (0, 0)))
        act_c = jnp.pad(act_c, ((0, pad), (0, 0)))

    grid = (padded // tm,)

    def batch_spec(cols):
        return pl.BlockSpec((tm, cols), lambda i: (i, 0))

    def resident_spec(a):   # whole-array block, VMEM-resident across the grid
        return pl.BlockSpec(a.shape, lambda i: (0, 0))

    flops = 2 * padded * (obs_dim * hidden + act_dim * hidden
                          + hidden * hidden + hidden * out_size)
    bytes_accessed = sum(int(a.size) * a.dtype.itemsize
                         for a in (obs_c, act_c, w1o, w1a, b1r, w2c, b2r, w3k, b3r))
    bytes_accessed += padded * out_size * 4

    out = pl.pallas_call(
        kernel,
        out_shape=jax.ShapeDtypeStruct((padded, out_size), jnp.float32),
        grid=grid,
        in_specs=[batch_spec(obs_dim), batch_spec(act_dim),
                  resident_spec(w1o), resident_spec(w1a), resident_spec(b1r),
                  resident_spec(w2c), resident_spec(b2r),
                  resident_spec(w3k), resident_spec(b3r)],
        out_specs=pl.BlockSpec((tm, out_size), lambda i: (i, 0)),
        compiler_params=pltpu.CompilerParams(
            dimension_semantics=("parallel",)),
        cost_estimate=pl.CostEstimate(flops=flops, transcendentals=0,
                                      bytes_accessed=bytes_accessed),
    )(obs_c, act_c, w1o, w1a, b1r, w2c, b2r, w3k, b3r)

    return out[:batch] if padded != batch else out


def init_critic_params(key, input_size, hidden_size, output_size):
    """Deterministic init mimicking torch.nn.Linear (uniform +/- 1/sqrt(fan_in))."""
    ks = jax.random.split(key, 6)

    def linear(kw, kb, fan_in, fan_out):
        bound = 1.0 / jnp.sqrt(jnp.float32(fan_in))
        w = jax.random.uniform(kw, (fan_in, fan_out), jnp.float32, -bound, bound)
        b = jax.random.uniform(kb, (fan_out,), jnp.float32, -bound, bound)
        return w, b

    w1, b1 = linear(ks[0], ks[1], input_size, hidden_size)
    w2, b2 = linear(ks[2], ks[3], hidden_size, hidden_size)
    w3, b3 = linear(ks[4], ks[5], hidden_size, output_size)
    return (w1, b1, w2, b2, w3, b3)


def critic_ref(obs, action, params):
    """Pure-JAX reference for correctness checking."""
    w1, b1, w2, b2, w3, b3 = params
    x = jnp.concatenate([obs, action], axis=1)
    x = jax.nn.relu(x @ w1 + b1)
    x = jax.nn.relu(x @ w2 + b2)
    return x @ w3 + b3


if __name__ == "__main__":
    # TODO(synk): Critic.fit/Adam/MSELoss are training-side; only forward() is kernelized.
    batch = 8
    obs_dim = 12
    action_dim = 4
    input_size = obs_dim + action_dim   # 16
    hidden_size = 32
    output_size = 1

    key = jax.random.PRNGKey(0)
    k_obs, k_act, k_params = jax.random.split(key, 3)

    obs = jax.random.normal(k_obs, (batch, obs_dim), jnp.float32)
    action = jax.random.normal(k_act, (batch, action_dim), jnp.float32)
    params = init_critic_params(k_params, input_size, hidden_size, output_size)

    q = critic_forward(obs, action, params)
    q = jax.block_until_ready(q)

    q_ref = critic_ref(obs, action, params)
    assert q.shape == (batch, output_size)
    assert jnp.allclose(q, q_ref, atol=1e-5, rtol=1e-5), "mismatch vs reference"

    print("KERNEL_OK")
</pallas_src>

<mosaic_0001>
module attributes {stable_mosaic.version = 11 : i64} {
  func.func @_critic_kernel_vec_out(%arg0: i32, %arg1: memref<8x12xf32, #tpu.memory_space<vmem>>, %arg2: memref<8x4xf32, #tpu.memory_space<vmem>>, %arg3: memref<12x32xf32, #tpu.memory_space<vmem>>, %arg4: memref<4x32xf32, #tpu.memory_space<vmem>>, %arg5: memref<1x32xf32, #tpu.memory_space<vmem>>, %arg6: memref<32x32xf32, #tpu.memory_space<vmem>>, %arg7: memref<1x32xf32, #tpu.memory_space<vmem>>, %arg8: memref<1x32xf32, #tpu.memory_space<vmem>>, %arg9: memref<1x1xf32, #tpu.memory_space<vmem>>, %arg10: memref<8x1xf32, #tpu.memory_space<vmem>>) attributes {dimension_semantics = [#tpu.dimension_semantics<parallel>], iteration_bounds = array<i64: 1>, scalar_prefetch = 0 : i64, scratch_operands = 0 : i64, tpu.core_type = #tpu.core_type<tc>, window_params = [{transform_indices = @transform_0, window_bounds = array<i64: 8, 12>}, {transform_indices = @transform_1, window_bounds = array<i64: 8, 4>}, {pipeline_mode = #tpu.pipeline_mode<synchronous>, transform_indices = @transform_2, window_bounds = array<i64: 12, 32>}, {pipeline_mode = #tpu.pipeline_mode<synchronous>, transform_indices = @transform_3, window_bounds = array<i64: 4, 32>}, {pipeline_mode = #tpu.pipeline_mode<synchronous>, transform_indices = @transform_4, window_bounds = array<i64: 1, 32>}, {pipeline_mode = #tpu.pipeline_mode<synchronous>, transform_indices = @transform_5, window_bounds = array<i64: 32, 32>}, {pipeline_mode = #tpu.pipeline_mode<synchronous>, transform_indices = @transform_6, window_bounds = array<i64: 1, 32>}, {pipeline_mode = #tpu.pipeline_mode<synchronous>, transform_indices = @transform_7, window_bounds = array<i64: 1, 32>}, {pipeline_mode = #tpu.pipeline_mode<synchronous>, transform_indices = @transform_8, window_bounds = array<i64: 1, 1>}, {transform_indices = @transform_9, window_bounds = array<i64: 8, 1>}]} {
    %c0 = arith.constant 0 : index
    %c0_0 = arith.constant 0 : index
    %0 = vector.load %arg1[%c0, %c0_0] : memref<8x12xf32, #tpu.memory_space<vmem>>, vector<8x12xf32>
    %c0_1 = arith.constant 0 : index
    %c0_2 = arith.constant 0 : index
    %1 = vector.load %arg3[%c0_1, %c0_2] : memref<12x32xf32, #tpu.memory_space<vmem>>, vector<12x32xf32>
    %cst = arith.constant dense<0.000000e+00> : vector<8x32xf32>
    %2 = tpu.matmul %0, %1, %cst {dimension_numbers = #tpu.dot_dimension_numbers<[1], [0], [0], [1], [0, 0, 1, 1], [], []>} : vector<8x12xf32>, vector<12x32xf32>, vector<8x32xf32> -> vector<8x32xf32>
    %c0_3 = arith.constant 0 : index
    %c0_4 = arith.constant 0 : index
    %3 = vector.load %arg2[%c0_3, %c0_4] : memref<8x4xf32, #tpu.memory_space<vmem>>, vector<8x4xf32>
    %c0_5 = arith.constant 0 : index
    %c0_6 = arith.constant 0 : index
    %4 = vector.load %arg4[%c0_5, %c0_6] : memref<4x32xf32, #tpu.memory_space<vmem>>, vector<4x32xf32>
    %cst_7 = arith.constant dense<0.000000e+00> : vector<8x32xf32>
    %5 = tpu.matmul %3, %4, %cst_7 {dimension_numbers = #tpu.dot_dimension_numbers<[1], [0], [0], [1], [0, 0, 1, 1], [], []>} : vector<8x4xf32>, vector<4x32xf32>, vector<8x32xf32> -> vector<8x32xf32>
    %6 = arith.addf %2, %5 : vector<8x32xf32>
    %c0_8 = arith.constant 0 : index
    %c0_9 = arith.constant 0 : index
    %7 = vector.load %arg5[%c0_8, %c0_9] : memref<1x32xf32, #tpu.memory_space<vmem>>, vector<1x32xf32>
    %8 = vector.broadcast %7 : vector<1x32xf32> to vector<8x32xf32>
    %9 = arith.addf %6, %8 : vector<8x32xf32>
    %cst_10 = arith.constant 0.000000e+00 : f32
    %10 = vector.broadcast %cst_10 : f32 to vector<8x32xf32>
    %11 = arith.maximumf %9, %10 : vector<8x32xf32>
    %c0_11 = arith.constant 0 : index
    %c0_12 = arith.constant 0 : index
    %12 = vector.load %arg6[%c0_11, %c0_12] : memref<32x32xf32, #tpu.memory_space<vmem>>, vector<32x32xf32>
    %cst_13 = arith.constant dense<0.000000e+00> : vector<8x32xf32>
    %13 = tpu.matmul %11, %12, %cst_13 {dimension_numbers = #tpu.dot_dimension_numbers<[1], [0], [0], [1], [0, 0, 1, 1], [], []>} : vector<8x32xf32>, vector<32x32xf32>, vector<8x32xf32> -> vector<8x32xf32>
    %c0_14 = arith.constant 0 : index
    %c0_15 = arith.constant 0 : index
    %14 = vector.load %arg7[%c0_14, %c0_15] : memref<1x32xf32, #tpu.memory_space<vmem>>, vector<1x32xf32>
    %15 = vector.broadcast %14 : vector<1x32xf32> to vector<8x32xf32>
    %16 = arith.addf %13, %15 : vector<8x32xf32>
    %cst_16 = arith.constant 0.000000e+00 : f32
    %17 = vector.broadcast %cst_16 : f32 to vector<8x32xf32>
    %18 = arith.maximumf %16, %17 : vector<8x32xf32>
    %c0_17 = arith.constant 0 : index
    %c0_18 = arith.constant 0 : index
    %19 = vector.load %arg8[%c0_17, %c0_18] : memref<1x32xf32, #tpu.memory_space<vmem>>, vector<1x32xf32>
    %20 = vector.broadcast %19 : vector<1x32xf32> to vector<8x32xf32>
    %21 = arith.mulf %18, %20 : vector<8x32xf32>
    %cst_19 = arith.constant dense<0.000000e+00> : vector<8xf32>
    %22 = vector.multi_reduction <add>, %21, %cst_19 [1] : vector<8x32xf32> to vector<8xf32>
    %23 = vector.shape_cast %22 : vector<8xf32> to vector<8x1xf32>
    %c0_20 = arith.constant 0 : index
    %c0_21 = arith.constant 0 : index
    %24 = vector.load %arg9[%c0_20, %c0_21] : memref<1x1xf32, #tpu.memory_space<vmem>>, vector<1x1xf32>
    %25 = vector.broadcast %24 : vector<1x1xf32> to vector<8x1xf32>
    %26 = arith.addf %23, %25 : vector<8x1xf32>
    %c0_22 = arith.constant 0 : index
    %c0_23 = arith.constant 0 : index
    %27 = vector.load %arg10[%c0_22, %c0_23] : memref<8x1xf32, #tpu.memory_space<vmem>>, vector<8x1xf32>
    tpu.vector_store %arg10[%c0_22, %c0_23], %26 {strides = array<i32>} : memref<8x1xf32, #tpu.memory_space<vmem>>, vector<8x1xf32>,
    return
  }
  func.func @transform_0(%arg0: i32) -> (i32, i32) {
    %c0_i32 = arith.constant 0 : i32
    %c0_i32_0 = arith.constant 0 : i32
    return %arg0, %c0_i32 : i32, i32
  }
  func.func @transform_1(%arg0: i32) -> (i32, i32) {
    %c0_i32 = arith.constant 0 : i32
    %c0_i32_0 = arith.constant 0 : i32
    return %arg0, %c0_i32 : i32, i32
  }
  func.func @transform_2(%arg0: i32) -> (i32, i32) {
    %c0_i32 = arith.constant 0 : i32
    %c0_i32_0 = arith.constant 0 : i32
    %c0_i32_1 = arith.constant 0 : i32
    return %c0_i32, %c0_i32_0 : i32, i32
  }
  func.func @transform_3(%arg0: i32) -> (i32, i32) {
    %c0_i32 = arith.constant 0 : i32
    %c0_i32_0 = arith.constant 0 : i32
    %c0_i32_1 = arith.constant 0 : i32
    return %c0_i32, %c0_i32_0 : i32, i32
  }
  func.func @transform_4(%arg0: i32) -> (i32, i32) {
    %c0_i32 = arith.constant 0 : i32
    %c0_i32_0 = arith.constant 0 : i32
    %c0_i32_1 = arith.constant 0 : i32
    return %c0_i32, %c0_i32_0 : i32, i32
  }
  func.func @transform_5(%arg0: i32) -> (i32, i32) {
    %c0_i32 = arith.constant 0 : i32
    %c0_i32_0 = arith.constant 0 : i32
    %c0_i32_1 = arith.constant 0 : i32
    return %c0_i32, %c0_i32_0 : i32, i32
  }
  func.func @transform_6(%arg0: i32) -> (i32, i32) {
    %c0_i32 = arith.constant 0 : i32
    %c0_i32_0 = arith.constant 0 : i32
    %c0_i32_1 = arith.constant 0 : i32
    return %c0_i32, %c0_i32_0 : i32, i32
  }
  func.func @transform_7(%arg0: i32) -> (i32, i32) {
    %c0_i32 = arith.constant 0 : i32
    %c0_i32_0 = arith.constant 0 : i32
    %c0_i32_1 = arith.constant 0 : i32
    return %c0_i32, %c0_i32_0 : i32, i32
  }
  func.func @transform_8(%arg0: i32) -> (i32, i32) {
    %c0_i32 = arith.constant 0 : i32
    %c0_i32_0 = arith.constant 0 : i32
    %c0_i32_1 = arith.constant 0 : i32
    return %c0_i32, %c0_i32_0 : i32, i32
  }
  func.func @transform_9(%arg0: i32) -> (i32, i32) {
    %c0_i32 = arith.constant 0 : i32
    %c0_i32_0 = arith.constant 0 : i32
    return %arg0, %c0_i32 : i32, i32
  }
}

</mosaic_0001>

<llo_original>
// kernel: tpu_custom_call.1
$region0: #{tpu_custom_call.1}
  #allocation0 [shape = 'u32[]', space=smem, size = 0x4, offset = 0x4, fixed_abs, tag = 'smem constant byte address 0x4 - core index']
  #allocation1 [shape = 'u32[144,128]{1,0:T(1,128)}', space=vmem, size = 0x12000, scoped, tag = 'internal scratch']
  #allocation2 [shape = 'f32[1,1]{1,0:T(1,128)S(1)}', space=vmem, size = 0x200, scoped, tag = 'scoped memory for tpu_custom_call.1']
  %s0 = inlined_call_operand.hbm [shape: f32[8,12], index: 0, kind: input, shape index: {}]
  %s1 = inlined_call_operand.vmem [shape: f32[8,4], index: 1, kind: input, shape index: {}]
  %s2 = inlined_call_operand.vmem [shape: f32[12,32], index: 2, kind: input, shape index: {}]
  %s3 = inlined_call_operand.hbm [shape: f32[4,32], index: 3, kind: input, shape index: {}]
  %s4 = inlined_call_operand.vmem [shape: f32[1,32], index: 4, kind: input, shape index: {}]
  %s5 = inlined_call_operand.hbm [shape: f32[32,32], index: 5, kind: input, shape index: {}]
  %s6 = inlined_call_operand.vmem [shape: f32[1,32], index: 6, kind: input, shape index: {}]
  %s7 = inlined_call_operand.vmem [shape: f32[1,32], index: 7, kind: input, shape index: {}]
  %s8 = inlined_call_operand.<no memory space> [shape: f32[1,1], index: 8, kind: input, shape index: {}]
  %s9 = inlined_call_operand.vmem [shape: f32[8,1], index: 9, kind: output, shape index: {}]
  %s10 = sld [smem:[#allocation0]]
  $region58: #{tpu_custom_call.1} parent=0
    _
  %s12 = ssub.s32 1, %s10
  %s13 = scalar_select 0, %s12, %s10
  %v14 = vstv %s8
  %15 = vst [vmem:[#allocation2] sm:$0x1] %v14
  $region1: #{tpu_custom_call.1} parent=0
    #allocation3 [shape = 'u8[4096]{0}', space=vmem, size = 0x1000, scoped, tag = 'input window, operand 0, single buffered']
    #allocation4 [shape = 's32[1]{0}', space=sflag, size = 0x4, scoped, tag = 'scoped memory for tpu_custom_call.1']
    #allocation5 [shape = 'u8[2048]{0}', space=vmem, size = 0x800, scoped, tag = 'input window, operand 3, single buffered']
    #allocation6 [shape = 's32[1]{0}', space=sflag, size = 0x4, scoped, tag = 'scoped memory for tpu_custom_call.1']
    #allocation7 [shape = 'u8[16384]{0}', space=vmem, size = 0x4000, scoped, tag = 'input window, operand 5, single buffered']
    %16 = vsyncpa [#allocation4], 0
    %17 = vsyncpa [#allocation6], 0
    // Predicated region
    $region2: #{tpu_custom_call.1} parent=1 // pred_check
      _
    $region3: #{tpu_custom_call.1} parent=1 // pred_check_branch
      %19 = sbr.rel (0) target = $region5
    $region4: #{tpu_custom_call.1} parent=1 // pred_region
      %s21 = ssub.s32 128, 128
      %22 = vsyncadd [#allocation4], %s21
      %s24 = sshll.u32 [#allocation3], 4
      %s25 = int_to_ptr.vmem [resolvable:$true] %s24
      %27 = dma.hbm_to_vmem [thread:$0]  %s0, 128, %s25, [#allocation4]
    $region5: #{tpu_custom_call.1} parent=1 // pred_fallthru
      _
    // Predicated region
    $region6: #{tpu_custom_call.1} parent=1 // pred_check
      _
    $region7: #{tpu_custom_call.1} parent=1 // pred_check_branch
      %29 = sbr.rel (0) target = $region9
    $region8: #{tpu_custom_call.1} parent=1 // pred_region
      _
    $region9: #{tpu_custom_call.1} parent=1 // pred_fallthru
      _
    // Predicated region
    $region10: #{tpu_custom_call.1} parent=1 // pred_check
      _
    $region11: #{tpu_custom_call.1} parent=1 // pred_check_branch
      %31 = sbr.rel (0) target = $region13
    $region12: #{tpu_custom_call.1} parent=1 // pred_region
      _
    $region13: #{tpu_custom_call.1} parent=1 // pred_fallthru
      _
    // Predicated region
    $region14: #{tpu_custom_call.1} parent=1 // pred_check
      _
    $region15: #{tpu_custom_call.1} parent=1 // pred_check_branch
      %33 = sbr.rel (0) target = $region17
    $region16: #{tpu_custom_call.1} parent=1 // pred_region
      %s35 = ssub.s32 64, 64
      %36 = vsyncadd [#allocation6], %s35
      %s38 = sshll.u32 [#allocation5], 4
      %s39 = int_to_ptr.vmem [resolvable:$true] %s38
      %41 = dma.hbm_to_vmem [thread:$0]  %s3, 64, %s39, [#allocation6]
    $region17: #{tpu_custom_call.1} parent=1 // pred_fallthru
      _
    // Predicated region
    $region18: #{tpu_custom_call.1} parent=1 // pred_check
      _
    $region19: #{tpu_custom_call.1} parent=1 // pred_check_branch
      %43 = sbr.rel (0) target = $region21
    $region20: #{tpu_custom_call.1} parent=1 // pred_region
      _
    $region21: #{tpu_custom_call.1} parent=1 // pred_fallthru
      _
    // Predicated region
    $region22: #{tpu_custom_call.1} parent=1 // pred_check
      _
    $region23: #{tpu_custom_call.1} parent=1 // pred_check_branch
      %45 = sbr.rel (0) target = $region25
    $region24: #{tpu_custom_call.1} parent=1 // pred_region
      %s47 = ssub.s32 512, 512
      %48 = vsyncadd [#allocation6], %s47
      %s49 = sshll.u32 [#allocation7], 4
      %s50 = int_to_ptr.vmem [resolvable:$true] %s49
      %55 = dma.hbm_to_vmem [thread:$0]  %s5, 512, %s50, [#allocation6], 128, 128, 8
    $region25: #{tpu_custom_call.1} parent=1 // pred_fallthru
      _
    // Predicated region
    $region26: #{tpu_custom_call.1} parent=1 // pred_check
      _
    $region27: #{tpu_custom_call.1} parent=1 // pred_check_branch
      %57 = sbr.rel (0) target = $region29
    $region28: #{tpu_custom_call.1} parent=1 // pred_region
      _
    $region29: #{tpu_custom_call.1} parent=1 // pred_fallthru
      _
    // Predicated region
    $region30: #{tpu_custom_call.1} parent=1 // pred_check
      _
    $region31: #{tpu_custom_call.1} parent=1 // pred_check_branch
      %59 = sbr.rel (0) target = $region33
    $region32: #{tpu_custom_call.1} parent=1 // pred_region
      _
    $region33: #{tpu_custom_call.1} parent=1 // pred_fallthru
      _
    // Predicated region
    $region34: #{tpu_custom_call.1} parent=1 // pred_check
      _
    $region35: #{tpu_custom_call.1} parent=1 // pred_check_branch
      %61 = sbr.rel (0) target = $region37
    $region36: #{tpu_custom_call.1} parent=1 // pred_region
      _
    $region37: #{tpu_custom_call.1} parent=1 // pred_fallthru
      _
    // Predicated region
    $region38: #{tpu_custom_call.1} parent=1 // pred_check
      _
    $region39: #{tpu_custom_call.1} parent=1 // pred_check_branch
      %63 = sbr.rel (0) target = $region41
    $region40: #{tpu_custom_call.1} parent=1 // pred_region
      %64 = dma.done [#allocation4], 128
    $region41: #{tpu_custom_call.1} parent=1 // pred_fallthru
      _
    // Predicated region
    $region42: #{tpu_custom_call.1} parent=1 // pred_check
      _
    $region43: #{tpu_custom_call.1} parent=1 // pred_check_branch
      %66 = sbr.rel (0) target = $region45
    $region44: #{tpu_custom_call.1} parent=1 // pred_region
      %67 = dma.done [#allocation6], 64
    $region45: #{tpu_custom_call.1} parent=1 // pred_fallthru
      _
    // Predicated region
    $region46: #{tpu_custom_call.1} parent=1 // pred_check
      _
    $region47: #{tpu_custom_call.1} parent=1 // pred_check_branch
      %69 = sbr.rel (0) target = $region49
    $region48: #{tpu_custom_call.1} parent=1 // pred_region
      %70 = dma.done [#allocation6], 512
    $region49: #{tpu_custom_call.1} parent=1 // pred_fallthru
      _
    %v71 = vld [vmem:[#allocation3] sm:$0xff]
    %v72 = vld [vmem:[%s2] sm:$0xff]
    %v73 = vld [vmem:[%s2 + $0x8] sm:$0xf]
    %v74 = vld [vmem:[%s1] sm:$0xff]
    %v75 = vld [vmem:[#allocation5] sm:$0xf]
    %vm76 = vcmask 31744
    %v78 = vsel %vm76, %v74, 0
    %vm80 = vcmask 1043456
    %v82 = vsel %vm80, %v75, 0
    %84 = vmatprep.subr.mxu0 0.0
    %85 = vmatpush1.msra.mxu0 0.0
    %86 = vmatprep.subr.mxu0 0.0
    %87 = vmatpush1.msra.mxu0 0.0
    %88 = vmatprep.subr.mxu0 0.0
    %89 = vmatpush1.msra.mxu0 0.0
    %90 = vmatprep.subr.mxu0 0.0
    %91 = vmatpush1.msra.mxu0 0.0
    %92 = vmatprep.subr.mxu0 0.0
    %93 = vmatpush1.msra.mxu0 0.0
    %94 = vmatprep.subr.mxu0 0.0
    %95 = vmatpush1.msra.mxu0 0.0
    %96 = vmatprep.subr.mxu0 0.0
    %97 = vmatpush1.msra.mxu0 0.0
    %98 = vmatprep.subr.mxu0 0.0
    %99 = vmatpush1.msra.mxu0 0.0
    %100 = vmatprep.subr.mxu0 0.0
    %101 = vmatpush1.msra.mxu0 0.0
    %102 = vmatprep.subr.mxu0 0.0
    %103 = vmatpush1.msra.mxu0 0.0
    %104 = vmatprep.subr.mxu0 0.0
    %105 = vmatpush1.msra.mxu0 0.0
    %106 = vmatprep.subr.mxu0 0.0
    %107 = vmatpush1.msra.mxu0 0.0
    %108 = vmatprep.subr.mxu0 0.0
    %109 = vmatpush1.msra.mxu0 0.0
    %110 = vmatprep.subr.mxu0 0.0
    %111 = vmatpush1.msra.mxu0 0.0
    %112 = vmatprep.subr.mxu0 0.0
    %113 = vmatpush1.msra.mxu0 0.0
    %114 = vmatprep.subr.mxu0 0.0
    %115 = vmatpush1.msra.mxu0 %v82
    %116 = vmatprep.subr.mxu0 0.0
    %117 = vmatpush2.msra.mxu0 0.0
    %118 = vmatprep.subr.mxu0 0.0
    %119 = vmatpush2.msra.mxu0 0.0
    %120 = vmatprep.subr.mxu0 0.0
    %121 = vmatpush2.msra.mxu0 0.0
    %122 = vmatprep.subr.mxu0 0.0
    %123 = vmatpush2.msra.mxu0 0.0
    %124 = vmatprep.subr.mxu0 0.0
    %125 = vmatpush2.msra.mxu0 0.0
    %126 = vmatprep.subr.mxu0 0.0
    %127 = vmatpush2.msra.mxu0 0.0
    %128 = vmatprep.subr.mxu0 0.0
    %129 = vmatpush2.msra.mxu0 0.0
    %130 = vmatprep.subr.mxu0 0.0
    %131 = vmatpush2.msra.mxu0 0.0
    %132 = vmatprep.subr.mxu0 0.0
    %133 = vmatpush2.msra.mxu0 0.0
    %134 = vmatprep.subr.mxu0 0.0
    %135 = vmatpush2.msra.mxu0 0.0
    %136 = vmatprep.subr.mxu0 0.0
    %137 = vmatpush2.msra.mxu0 0.0
    %138 = vmatprep.subr.mxu0 0.0
    %139 = vmatpush2.msra.mxu0 0.0
    %140 = vmatprep.subr.mxu0 0.0
    %141 = vmatpush2.msra.mxu0 0.0
    %142 = vmatprep.subr.mxu0 0.0
    %143 = vmatpush2.msra.mxu0 0.0
    %144 = vmatprep.subr.mxu0 0.0
    %145 = vmatpush2.msra.mxu0 0.0
    %146 = vmatprep.subr.mxu0 0.0
    %147 = vmatpush2.msra.mxu0 0.0
    %148 = vmatprep.mubr.f32.mxu0 0.0
    %149 = vmatmul.mubr.f32.gmra.mxu0 %v78
    %v150 = vpop.f32.mrf.mxu0
    %v151 = vadd.f32 0.0, %v150
    %v152 = vpop.f32.mrf.mxu0
    %153 = vdwg.mxu0
    %vm154 = vcmask 97280
    %v156 = vsel %vm154, %v71, 0
    %v159 = vsel %vm80, %v73, 0
    %161 = vmatprep.subr.mxu0 0.0
    %162 = vmatpush1.msra.mxu0 0.0
    %163 = vmatprep.subr.mxu0 0.0
    %164 = vmatpush1.msra.mxu0 0.0
    %165 = vmatprep.subr.mxu0 0.0
    %166 = vmatpush1.msra.mxu0 0.0
    %167 = vmatprep.subr.mxu0 0.0
    %168 = vmatpush1.msra.mxu0 0.0
    %169 = vmatprep.subr.mxu0 0.0
    %170 = vmatpush1.msra.mxu0 0.0
    %171 = vmatprep.subr.mxu0 0.0
    %172 = vmatpush1.msra.mxu0 0.0
    %173 = vmatprep.subr.mxu0 0.0
    %174 = vmatpush1.msra.mxu0 0.0
    %175 = vmatprep.subr.mxu0 0.0
    %176 = vmatpush1.msra.mxu0 0.0
    %177 = vmatprep.subr.mxu0 0.0
    %178 = vmatpush1.msra.mxu0 0.0
    %179 = vmatprep.subr.mxu0 0.0
    %180 = vmatpush1.msra.mxu0 0.0
    %181 = vmatprep.subr.mxu0 0.0
    %182 = vmatpush1.msra.mxu0 0.0
    %183 = vmatprep.subr.mxu0 0.0
    %184 = vmatpush1.msra.mxu0 0.0
    %185 = vmatprep.subr.mxu0 0.0
    %186 = vmatpush1.msra.mxu0 0.0
    %187 = vmatprep.subr.mxu0 0.0
    %188 = vmatpush1.msra.mxu0 0.0
    %189 = vmatprep.subr.mxu0 0.0
    %190 = vmatpush1.msra.mxu0 %v159
    %191 = vmatprep.subr.mxu0 0.0
    %192 = vmatpush1.msra.mxu0 %v72
    %193 = vmatprep.subr.mxu0 0.0
    %194 = vmatpush2.msra.mxu0 0.0
    %195 = vmatprep.subr.mxu0 0.0
    %196 = vmatpush2.msra.mxu0 0.0
    %197 = vmatprep.subr.mxu0 0.0
    %198 = vmatpush2.msra.mxu0 0.0
    %199 = vmatprep.subr.mxu0 0.0
    %200 = vmatpush2.msra.mxu0 0.0
    %201 = vmatprep.subr.mxu0 0.0
    %202 = vmatpush2.msra.mxu0 0.0
    %203 = vmatprep.subr.mxu0 0.0
    %204 = vmatpush2.msra.mxu0 0.0
    %205 = vmatprep.subr.mxu0 0.0
    %206 = vmatpush2.msra.mxu0 0.0
    %207 = vmatprep.subr.mxu0 0.0
    %208 = vmatpush2.msra.mxu0 0.0
    %209 = vmatprep.subr.mxu0 0.0
    %210 = vmatpush2.msra.mxu0 0.0
    %211 = vmatprep.subr.mxu0 0.0
    %212 = vmatpush2.msra.mxu0 0.0
    %213 = vmatprep.subr.mxu0 0.0
    %214 = vmatpush2.msra.mxu0 0.0
    %215 = vmatprep.subr.mxu0 0.0
    %216 = vmatpush2.msra.mxu0 0.0
    %217 = vmatprep.subr.mxu0 0.0
    %218 = vmatpush2.msra.mxu0 0.0
    %219 = vmatprep.subr.mxu0 0.0
    %220 = vmatpush2.msra.mxu0 0.0
    %221 = vmatprep.subr.mxu0 0.0
    %222 = vmatpush2.msra.mxu0 0.0
    %223 = vmatprep.subr.mxu0 0.0
    %224 = vmatpush2.msra.mxu0 0.0
    %225 = vmatprep.mubr.f32.mxu0 0.0
    %226 = vmatmul.mubr.f32.gmra.mxu0 %v156
    %v227 = vpop.f32.mrf.mxu0
    %v228 = vadd.f32 %v151, %v227
    %v229 = vpop.f32.mrf.mxu0
    %230 = vdwg.mxu0
    %v231 = vld [vmem:[%s4] sm:$0x1]
    %v233 = vlaneseq
    %v234 = vshrl.u32 %v233, 7
    %v235 = vsub.s32 0, %v234
    %v236 = vrot.slane %v231, %v235
    %v238 = vadd.f32 %v228, %v236
    %v239 = vmax.f32 %v238, 0.0
    %v240 = vld [vmem:[#allocation7] sm:$0xff]
    %v241 = vld [vmem:[#allocation7 + $0x8] sm:$0xff]
    %v242 = vld [vmem:[#allocation7 + $0x10] sm:$0xff]
    %v243 = vld [vmem:[#allocation7 + $0x18] sm:$0xff]
    %v244 = vld [vmem:[%s6] sm:$0x1]
    %v246 = vlaneseq
    %v247 = vshrl.u32 %v246, 7
    %v248 = vsub.s32 0, %v247
    %v249 = vrot.slane %v244, %v248
    %vm251 = vcmask 261120
    %v253 = vsel %vm251, %v239, 0
    %255 = vmatprep.subr.mxu0 0.0
    %256 = vmatpush1.msra.mxu0 0.0
    %257 = vmatprep.subr.mxu0 0.0
    %258 = vmatpush1.msra.mxu0 0.0
    %259 = vmatprep.subr.mxu0 0.0
    %260 = vmatpush1.msra.mxu0 0.0
    %261 = vmatprep.subr.mxu0 0.0
    %262 = vmatpush1.msra.mxu0 0.0
    %263 = vmatprep.subr.mxu0 0.0
    %264 = vmatpush1.msra.mxu0 0.0
    %265 = vmatprep.subr.mxu0 0.0
    %266 = vmatpush1.msra.mxu0 0.0
    %267 = vmatprep.subr.mxu0 0.0
    %268 = vmatpush1.msra.mxu0 0.0
    %269 = vmatprep.subr.mxu0 0.0
    %270 = vmatpush1.msra.mxu0 0.0
    %271 = vmatprep.subr.mxu0 0.0
    %272 = vmatpush1.msra.mxu0 0.0
    %273 = vmatprep.subr.mxu0 0.0
    %274 = vmatpush1.msra.mxu0 0.0
    %275 = vmatprep.subr.mxu0 0.0
    %276 = vmatpush1.msra.mxu0 0.0
    %277 = vmatprep.subr.mxu0 0.0
    %278 = vmatpush1.msra.mxu0 0.0
    %279 = vmatprep.subr.mxu0 0.0
    %280 = vmatpush1.msra.mxu0 %v243
    %281 = vmatprep.subr.mxu0 0.0
    %282 = vmatpush1.msra.mxu0 %v242
    %283 = vmatprep.subr.mxu0 0.0
    %284 = vmatpush1.msra.mxu0 %v241
    %285 = vmatprep.subr.mxu0 0.0
    %286 = vmatpush1.msra.mxu0 %v240
    %287 = vmatprep.subr.mxu0 0.0
    %288 = vmatpush2.msra.mxu0 0.0
    %289 = vmatprep.subr.mxu0 0.0
    %290 = vmatpush2.msra.mxu0 0.0
    %291 = vmatprep.subr.mxu0 0.0
    %292 = vmatpush2.msra.mxu0 0.0
    %293 = vmatprep.subr.mxu0 0.0
    %294 = vmatpush2.msra.mxu0 0.0
    %295 = vmatprep.subr.mxu0 0.0
    %296 = vmatpush2.msra.mxu0 0.0
    %297 = vmatprep.subr.mxu0 0.0
    %298 = vmatpush2.msra.mxu0 0.0
    %299 = vmatprep.subr.mxu0 0.0
    %300 = vmatpush2.msra.mxu0 0.0
    %301 = vmatprep.subr.mxu0 0.0
    %302 = vmatpush2.msra.mxu0 0.0
    %303 = vmatprep.subr.mxu0 0.0
    %304 = vmatpush2.msra.mxu0 0.0
    %305 = vmatprep.subr.mxu0 0.0
    %306 = vmatpush2.msra.mxu0 0.0
    %307 = vmatprep.subr.mxu0 0.0
    %308 = vmatpush2.msra.mxu0 0.0
    %309 = vmatprep.subr.mxu0 0.0
    %310 = vmatpush2.msra.mxu0 0.0
    %311 = vmatprep.subr.mxu0 0.0
    %312 = vmatpush2.msra.mxu0 0.0
    %313 = vmatprep.subr.mxu0 0.0
    %314 = vmatpush2.msra.mxu0 0.0
    %315 = vmatprep.subr.mxu0 0.0
    %316 = vmatpush2.msra.mxu0 0.0
    %317 = vmatprep.subr.mxu0 0.0
    %318 = vmatpush2.msra.mxu0 0.0
    %319 = vmatprep.mubr.f32.mxu0 0.0
    %320 = vmatmul.mubr.f32.gmra.mxu0 %v253
    %v321 = vpop.f32.mrf.mxu0
    %v322 = vadd.f32 %v249, %v321
    %v323 = vpop.f32.mrf.mxu0
    %324 = vdwg.mxu0
    %v325 = vmax.f32 %v322, 0.0
    %v326 = vld [vmem:[%s7] sm:$0x1]
    %v328 = vlaneseq
    %v329 = vshrl.u32 %v328, 7
    %v330 = vsub.s32 0, %v329
    %v331 = vrot.slane %v326, %v330
    %v333 = vmul.f32 %v325, %v331
    %v334 = vsel %vm251, %v333, 0.0
    %335 = vadd.xlane.f32.xlu0 %v334
    %v336 = vpop.xlane.xlu0 %335
    %v337 = vld [vmem:[#allocation2] sm:$0x1]
    %v339 = vlaneseq
    %v340 = vshrl.u32 %v339, 7
    %v341 = vsub.s32 0, %v340
    %v342 = vrot.slane %v337, %v341
    %v344 = vadd.f32 %v336, %v342
    %vm345 = vcmask 7168
    %346 = vst.msk [vmem:[%s9] sm:$0xff] %vm345, %v344
    // Predicated region
    $region50: #{tpu_custom_call.1} parent=1 // pred_check
      _
    $region51: #{tpu_custom_call.1} parent=1 // pred_check_branch
      %348 = sbr.rel (0) target = $region53
    $region52: #{tpu_custom_call.1} parent=1 // pred_region
      _
    $region53: #{tpu_custom_call.1} parent=1 // pred_fallthru
      _
    // Predicated region
    $region54: #{tpu_custom_call.1} parent=1 // pred_check
      _
    $region55: #{tpu_custom_call.1} parent=1 // pred_check_branch
      %350 = sbr.rel (0) target = $region57
    $region56: #{tpu_custom_call.1} parent=1 // pred_region
      _
    $region57: #{tpu_custom_call.1} parent=1 // pred_fallthru
      _
    %351 = vsyncpa [#allocation4], 1
    %352 = vsyncpa [#allocation6], 1

</llo_original>
